<compile_context>
chip_gen: v6e
topology: v6e:2x2x1
jax: 0.10.0
libtpu: 0.0.40
codegen_flags: <defaults>
</compile_context>

<pallas_src>
import jax
import jax.numpy as jnp
from jax.experimental import pallas as pl
from jax.experimental.pallas import tpu as pltpu

# ---- module hyper-parameters (small, consistent with the PyTorch module) ----
BATCH = 2
C_IN = 4
C_OUT = 8
SPATIAL = 16          # D = H = W
KSIZE = 3
PAD = 1
BN_EPS = 1e-5         # BatchNorm3d / InPlaceABN default eps
NEG_SLOPE = 0.01      # InPlaceABN default leaky_relu slope
ROW_TILE = 128        # output rows per grid step
# TODO(synk): stride != 1 (used by some mvsnerf ConvBnReLU3D instances) and
#             training-mode InPlaceABN batch statistics are not implemented;
#             this kernel covers the default stride=1, pad=1 inference path.


def conv_bn_relu_kernel(x_ref, w_ref, b_ref, o_ref):
    """One row-block of the fused (im2col) Conv3d + folded BN + LeakyReLU.

    x_ref: (ROW_TILE, K_pad)    bf16 im2col rows
    w_ref: (K_pad, W*C_out)     bf16 lowered conv weight, BN scale folded in
    b_ref: (1, W*C_out)         f32 folded BN bias
    o_ref: (ROW_TILE, W*C_out)  f32 output rows (lane-dense)
    """
    y = jnp.dot(x_ref[...], w_ref[...], preferred_element_type=jnp.float32)
    y = y + b_ref[...]                                   # folded BN bias
    o_ref[...] = jnp.where(y >= 0.0, y, NEG_SLOPE * y)   # LeakyReLU(0.01)


def _bn_fold(params):
    scale = params["gamma"] * jax.lax.rsqrt(params["running_var"] + BN_EPS)
    bias = params["beta"] - params["running_mean"] * scale
    return scale, bias


def prepare_folded_params(params, w_out):
    """BN fold + Toeplitz lowering of the conv weight.  Run ONCE per param set
    (hoisted out of the per-forward hot path)."""
    weight = params["weight"]                               # (C_out, C_in, 3, 3, 3)
    c_out, c_in = weight.shape[:2]
    scale, bias = _bn_fold(params)
    w_t = jnp.transpose(weight, (2, 3, 4, 1, 0)) * scale    # (KD, KH, KW, C_in, C_out)

    wp = w_out + 2 * PAD
    # sel[kw, wp, w] = 1 iff wp == w + kw  (maps padded-row lanes to output cols)
    sel = (jnp.arange(wp)[None, :, None]
           == (jnp.arange(w_out)[None, None, :] + jnp.arange(KSIZE)[:, None, None]))
    sel = sel.astype(jnp.float32)
    m = jnp.einsum("xpw,dhxio->dhpiwo", sel, w_t)           # (KD,KH,Wp,C_in,W,C_out)
    m = m.reshape(KSIZE * KSIZE * wp * c_in, w_out * c_out)  # (648, 128)

    k = m.shape[0]
    k_pad = pl.cdiv(k, 128) * 128                            # 648 -> 768
    m = jnp.pad(m, ((0, k_pad - k), (0, 0))).astype(jnp.bfloat16)
    bias_row = jnp.tile(bias, w_out).reshape(1, w_out * c_out).astype(jnp.float32)
    return m, bias_row


@jax.jit
def conv_bn_relu_3d(x, m_lowered, bias_row):
    """x: (B, C_in, D, H, W) f32 (PyTorch NCDHW).  Returns (B, C_out, D, H, W) f32."""
    B, c_in, D, H, W = x.shape
    n_out = bias_row.shape[1]
    c_out = n_out // W
    k_pad = m_lowered.shape[0]

    # --- wrapper-side im2col (layout plumbing; no in-kernel relayout copies) ---
    x_cl = jnp.transpose(x, (0, 2, 3, 4, 1))                 # (B, D, H, W, C_in)
    x_pad = jnp.pad(x_cl, ((0, 0), (PAD, PAD), (PAD, PAD), (PAD, PAD), (0, 0)))
    Dp, Hp, Wp = D + 2 * PAD, H + 2 * PAD, W + 2 * PAD
    x_pad = x_pad.reshape(B, Dp, Hp, Wp * c_in)
    taps = [x_pad[:, kd:kd + D, kh:kh + H, :]                # 9 x (B, D, H, Wp*C_in)
            for kd in range(KSIZE) for kh in range(KSIZE)]
    col = jnp.concatenate(taps, axis=-1)                     # (B, D, H, 9*Wp*C_in)
    rows = B * D * H
    k = KSIZE * KSIZE * Wp * c_in
    col = col.reshape(rows, k)
    col = jnp.pad(col, ((0, 0), (0, k_pad - k))).astype(jnp.bfloat16)

    row_tile = ROW_TILE if rows % ROW_TILE == 0 else rows
    grid = (rows // row_tile,)

    out2d = pl.pallas_call(
        conv_bn_relu_kernel,
        out_shape=jax.ShapeDtypeStruct((rows, n_out), jnp.float32),
        grid_spec=pltpu.PrefetchScalarGridSpec(
            num_scalar_prefetch=0,
            grid=grid,
            in_specs=[
                # im2col rows: pipelined per grid step
                pl.BlockSpec((row_tile, k_pad), lambda i: (i, 0)),
                # lowered weight: constant index_map -> resident, single-buffered
                pl.BlockSpec((k_pad, n_out), lambda i: (0, 0),
                             pipeline_mode=pl.Buffered(1)),
                # folded BN bias: resident, single-buffered
                pl.BlockSpec((1, n_out), lambda i: (0, 0),
                             pipeline_mode=pl.Buffered(1)),
            ],
            out_specs=pl.BlockSpec((row_tile, n_out), lambda i: (i, 0)),
        ),
        compiler_params=pltpu.CompilerParams(
            dimension_semantics=("parallel",),       # row blocks independent; uses both v7x TCs
            vmem_limit_bytes=32 * 1024 * 1024),
    )(col, m_lowered, bias_row)

    out = out2d.reshape(B, D, H, W, c_out)
    # TODO(synk): keep the channel-last layout if the consumer allows; NCDHW is
    #             restored here only for parity with the PyTorch module.
    return jnp.transpose(out, (0, 4, 1, 2, 3))


def init_params(key):
    kw, kg, kb, km, kv = jax.random.split(key, 5)
    fan_in = C_IN * KSIZE ** 3
    return {
        "weight": jax.random.normal(kw, (C_OUT, C_IN, KSIZE, KSIZE, KSIZE),
                                    jnp.float32) / jnp.sqrt(float(fan_in)),
        "gamma": 1.0 + 0.1 * jax.random.normal(kg, (C_OUT,), jnp.float32),
        "beta": 0.1 * jax.random.normal(kb, (C_OUT,), jnp.float32),
        "running_mean": 0.1 * jax.random.normal(km, (C_OUT,), jnp.float32),
        "running_var": 1.0 + 0.5 * jax.random.uniform(kv, (C_OUT,), jnp.float32),
    }


def reference_conv_bn_relu(x, params):
    """Full-f32 pure-JAX reference mirroring the PyTorch forward (inference BN)."""
    y = jax.lax.conv_general_dilated(
        x, params["weight"], window_strides=(1, 1, 1), padding=[(PAD, PAD)] * 3,
        dimension_numbers=("NCDHW", "OIDHW", "NCDHW"),
        precision=jax.lax.Precision.HIGHEST)
    scale, bias = _bn_fold(params)
    y = y * scale[None, :, None, None, None] + bias[None, :, None, None, None]
    return jnp.where(y >= 0.0, y, NEG_SLOPE * y)


def reference_bf16_operands(x, params):
    """Reference with the same bf16 operand quantization the kernel uses
    (folded weight and input rounded to bf16, f32 accumulation)."""
    scale, bias = _bn_fold(params)
    w_t = jnp.transpose(params["weight"], (2, 3, 4, 1, 0)) * scale
    w_q = w_t.astype(jnp.bfloat16).astype(jnp.float32)       # same rounding as kernel weight
    w_oidhw = jnp.transpose(w_q, (4, 3, 0, 1, 2))
    x_q = x.astype(jnp.bfloat16).astype(jnp.float32)         # same rounding as im2col slab
    y = jax.lax.conv_general_dilated(
        x_q, w_oidhw, window_strides=(1, 1, 1), padding=[(PAD, PAD)] * 3,
        dimension_numbers=("NCDHW", "OIDHW", "NCDHW"),
        precision=jax.lax.Precision.HIGHEST)
    y = y + bias[None, :, None, None, None]
    return jnp.where(y >= 0.0, y, NEG_SLOPE * y)


if __name__ == "__main__":
    key = jax.random.PRNGKey(0)
    kx, kp = jax.random.split(key)
    x = jax.random.normal(kx, (BATCH, C_IN, SPATIAL, SPATIAL, SPATIAL), jnp.float32)
    params = init_params(kp)

    # BN fold + weight lowering: once per parameter set, outside the hot path.
    m_lowered, bias_row = prepare_folded_params(params, SPATIAL)
    m_lowered, bias_row = jax.block_until_ready((m_lowered, bias_row))

    out = conv_bn_relu_3d(x, m_lowered, bias_row)
    jax.block_until_ready(out)

    # Tight check: reference with identical bf16 operand quantization.
    ref_q = reference_bf16_operands(x, params)
    assert out.shape == ref_q.shape, (out.shape, ref_q.shape)
    assert jnp.allclose(out, ref_q, atol=2e-3, rtol=2e-3), \
        float(jnp.max(jnp.abs(out - ref_q)))

    # Sanity check vs. the full-precision PyTorch-style forward (looser: the
    # only difference is the bf16 rounding of the matmul operands).
    ref = reference_conv_bn_relu(x, params)
    assert jnp.allclose(out, ref, atol=5e-2, rtol=5e-2), \
        float(jnp.max(jnp.abs(out - ref)))

    print("KERNEL_OK")
</pallas_src>

<mosaic_0001>
module attributes {stable_mosaic.version = 11 : i64} {
  func.func @conv_bn_relu_kernel(%arg0: i32, %arg1: memref<128x768xbf16, #tpu.memory_space<vmem>>, %arg2: memref<768x128xbf16, #tpu.memory_space<vmem>>, %arg3: memref<1x128xf32, #tpu.memory_space<vmem>>, %arg4: memref<128x128xf32, #tpu.memory_space<vmem>>) attributes {dimension_semantics = [#tpu.dimension_semantics<parallel>], iteration_bounds = array<i64: 4>, scalar_prefetch = 0 : i64, scratch_operands = 0 : i64, tpu.core_type = #tpu.core_type<tc>, window_params = [{transform_indices = @transform_0, window_bounds = array<i64: 128, 768>}, {pipeline_mode = #tpu.pipeline_mode<synchronous>, transform_indices = @transform_1, window_bounds = array<i64: 768, 128>}, {pipeline_mode = #tpu.pipeline_mode<synchronous>, transform_indices = @transform_2, window_bounds = array<i64: 1, 128>}, {transform_indices = @transform_3, window_bounds = array<i64: 128, 128>}]} {
    %c0 = arith.constant 0 : index
    %c0_0 = arith.constant 0 : index
    %0 = vector.load %arg1[%c0, %c0_0] : memref<128x768xbf16, #tpu.memory_space<vmem>>, vector<128x768xbf16>
    %c0_1 = arith.constant 0 : index
    %c0_2 = arith.constant 0 : index
    %1 = vector.load %arg2[%c0_1, %c0_2] : memref<768x128xbf16, #tpu.memory_space<vmem>>, vector<768x128xbf16>
    %cst = arith.constant dense<0.000000e+00> : vector<128x128xf32>
    %2 = tpu.matmul %0, %1, %cst {dimension_numbers = #tpu.dot_dimension_numbers<[1], [0], [0], [1], [0, 0, 1, 1], [], []>} : vector<128x768xbf16>, vector<768x128xbf16>, vector<128x128xf32> -> vector<128x128xf32>
    %c0_3 = arith.constant 0 : index
    %c0_4 = arith.constant 0 : index
    %3 = vector.load %arg3[%c0_3, %c0_4] : memref<1x128xf32, #tpu.memory_space<vmem>>, vector<1x128xf32>
    %4 = vector.broadcast %3 : vector<1x128xf32> to vector<128x128xf32>
    %5 = arith.addf %2, %4 : vector<128x128xf32>
    %cst_5 = arith.constant 0.000000e+00 : f32
    %6 = vector.broadcast %cst_5 : f32 to vector<128x128xf32>
    %7 = arith.cmpf oge, %5, %6 : vector<128x128xf32>
    %cst_6 = arith.constant 0.00999999977 : f32
    %8 = vector.broadcast %cst_6 : f32 to vector<128x128xf32>
    %9 = arith.mulf %8, %5 : vector<128x128xf32>
    %10 = arith.select %7, %5, %9 : vector<128x128xi1>, vector<128x128xf32>
    %c0_7 = arith.constant 0 : index
    %c0_8 = arith.constant 0 : index
    %11 = vector.load %arg4[%c0_7, %c0_8] : memref<128x128xf32, #tpu.memory_space<vmem>>, vector<128x128xf32>
    tpu.vector_store %arg4[%c0_7, %c0_8], %10 {strides = array<i32>} : memref<128x128xf32, #tpu.memory_space<vmem>>, vector<128x128xf32>,
    return
  }
  func.func @transform_0(%arg0: i32) -> (i32, i32) {
    %c0_i32 = arith.constant 0 : i32
    %c0_i32_0 = arith.constant 0 : i32
    return %arg0, %c0_i32 : i32, i32
  }
  func.func @transform_1(%arg0: i32) -> (i32, i32) {
    %c0_i32 = arith.constant 0 : i32
    %c0_i32_0 = arith.constant 0 : i32
    %c0_i32_1 = arith.constant 0 : i32
    return %c0_i32, %c0_i32_0 : i32, i32
  }
  func.func @transform_2(%arg0: i32) -> (i32, i32) {
    %c0_i32 = arith.constant 0 : i32
    %c0_i32_0 = arith.constant 0 : i32
    %c0_i32_1 = arith.constant 0 : i32
    return %c0_i32, %c0_i32_0 : i32, i32
  }
  func.func @transform_3(%arg0: i32) -> (i32, i32) {
    %c0_i32 = arith.constant 0 : i32
    %c0_i32_0 = arith.constant 0 : i32
    return %arg0, %c0_i32 : i32, i32
  }
}

</mosaic_0001>

<llo_original>
// kernel: conv_bn_relu_3d.1
$region0: #{conv_bn_relu_3d.1}
  #allocation0 [shape = 'u32[]', space=smem, size = 0x4, offset = 0x4, fixed_abs, tag = 'smem constant byte address 0x4 - core index']
  #allocation1 [shape = 'u32[144,128]{1,0:T(1,128)}', space=vmem, size = 0x12000, scoped, tag = 'internal scratch']
  %s0 = inlined_call_operand.vmem [shape: bf16[512,768], index: 0, kind: input, shape index: {}]
  %s1 = inlined_call_operand.vmem [shape: bf16[768,128], index: 1, kind: input, shape index: {}]
  %s2 = inlined_call_operand.vmem [shape: f32[1,128], index: 2, kind: input, shape index: {}]
  %s3 = inlined_call_operand.vmem [shape: f32[512,128], index: 3, kind: output, shape index: {}]
  %s4 = sld [smem:[#allocation0]]
  $region45: #{conv_bn_relu_3d.1} parent=0
    _
  %s6 = ssub.s32 1, %s4
  %s7 = scalar_select 0, %s6, %s4
  loop: start=0, step=1, limit=6
  $region2: #{conv_bn_relu_3d.1} parent=0 // loop_pre_header
    _
  $region3: #{conv_bn_relu_3d.1} parent=0 // loop_header
    %s9 = sphi 0, %s13
    %p10 = scmp.ge.s32.totalorder %s9, 6
    %s19 = sphi 0, %s21
    %s22 = sphi 0, %s19
    %s23 = sphi 0, %s22
    %s39 = sphi 0, %s23
    %s43 = sphi 0, %s43
    %s45 = sphi 0, %s43
    %s46 = sphi 0, %s45
    %s60 = sphi 0, %s46
    %s64 = sphi 0, %s64
    %s66 = sphi 0, %s64
    %s67 = sphi 0, %s66
    %s81 = sphi 0, %s67
    %s87 = sphi 0, %s89
    %s90 = sphi 0, %s87
    %s91 = sphi 0, %s90
    %s107 = sphi 0, %s91
  $region4: #{conv_bn_relu_3d.1} parent=0 // loop_header_branch
    %12 = sbr.rel (%p10) target = $region8
  $region5: #{conv_bn_relu_3d.1} parent=0 // loop_body
    %s14 = ssub.s32 %s9, 1
    %s15 = ssub.s32 %s9, 2
    %s16 = sadd.s32 %s9, 1
    %s17 = ssub.s32 %s9, %s16
    %p18 = scmp.eq.s32.totalorder %s17, 0
    %s20 = sadd.s32 %s19, 1
    %s21 = scalar_select %p18, %s19, %s20
    %p24 = pneg %p18
    %p25 = scmp.eq.s32.totalorder %s9, 3
    %p26 = por %p24, %p25
    %p27 = scmp.ne.s32.totalorder %s19, %s22
    %p28 = scmp.eq.s32.totalorder %s9, 0
    %p29 = por %p27, %p28
    %p30 = scmp.ne.s32.totalorder %s19, %s22
    %p31 = scmp.eq.s32.totalorder %s14, 3
    %p32 = por %p30, %p31
    %p33 = scmp.ne.s32.totalorder %s22, %s23
    %p34 = scmp.eq.s32.totalorder %s14, 0
    %p35 = por %p33, %p34
    %p36 = scmp.ne.s32.totalorder %s22, %s23
    %p37 = scmp.eq.s32.totalorder %s15, 3
    %p38 = por %p36, %p37
    %p40 = scmp.ne.s32.totalorder %s23, %s39
    %p41 = scmp.eq.s32.totalorder %s15, 0
    %p42 = por %p40, %p41
    %s44 = sadd.s32 %s43, 1
    %p47 = scmp.eq.s32.totalorder %s9, 3
    %p48 = scmp.ne.s32.totalorder %s43, %s45
    %p49 = scmp.eq.s32.totalorder %s9, 0
    %p50 = por %p48, %p49
    %p51 = scmp.ne.s32.totalorder %s43, %s45
    %p52 = scmp.eq.s32.totalorder %s14, 3
    %p53 = por %p51, %p52
    %p54 = scmp.ne.s32.totalorder %s45, %s46
    %p55 = scmp.eq.s32.totalorder %s14, 0
    %p56 = por %p54, %p55
    %p57 = scmp.ne.s32.totalorder %s45, %s46
    %p58 = scmp.eq.s32.totalorder %s15, 3
    %p59 = por %p57, %p58
    %p61 = scmp.ne.s32.totalorder %s46, %s60
    %p62 = scmp.eq.s32.totalorder %s15, 0
    %p63 = por %p61, %p62
    %s65 = sadd.s32 %s64, 1
    %p68 = scmp.eq.s32.totalorder %s9, 3
    %p69 = scmp.ne.s32.totalorder %s64, %s66
    %p70 = scmp.eq.s32.totalorder %s9, 0
    %p71 = por %p69, %p70
    %p72 = scmp.ne.s32.totalorder %s64, %s66
    %p73 = scmp.eq.s32.totalorder %s14, 3
    %p74 = por %p72, %p73
    %p75 = scmp.ne.s32.totalorder %s66, %s67
    %p76 = scmp.eq.s32.totalorder %s14, 0
    %p77 = por %p75, %p76
    %p78 = scmp.ne.s32.totalorder %s66, %s67
    %p79 = scmp.eq.s32.totalorder %s15, 3
    %p80 = por %p78, %p79
    %p82 = scmp.ne.s32.totalorder %s67, %s81
    %p83 = scmp.eq.s32.totalorder %s15, 0
    %p84 = por %p82, %p83
    %s85 = ssub.s32 %s9, %s16
    %p86 = scmp.eq.s32.totalorder %s85, 0
    %s88 = sadd.s32 %s87, 1
    %s89 = scalar_select %p86, %s87, %s88
    %p92 = pneg %p86
    %p93 = scmp.eq.s32.totalorder %s9, 3
    %p94 = por %p92, %p93
    %p95 = scmp.ne.s32.totalorder %s87, %s90
    %p96 = scmp.eq.s32.totalorder %s9, 0
    %p97 = por %p95, %p96
    %p98 = scmp.ne.s32.totalorder %s87, %s90
    %p99 = scmp.eq.s32.totalorder %s14, 3
    %p100 = por %p98, %p99
    %p101 = scmp.ne.s32.totalorder %s90, %s91
    %p102 = scmp.eq.s32.totalorder %s14, 0
    %p103 = por %p101, %p102
    %p104 = scmp.ne.s32.totalorder %s90, %s91
    %p105 = scmp.eq.s32.totalorder %s15, 3
    %p106 = por %p104, %p105
    %p108 = scmp.ne.s32.totalorder %s91, %s107
    %p109 = scmp.eq.s32.totalorder %s15, 0
    %p110 = por %p108, %p109
    %p111 = scmp.le.s32.totalorder 1, %s9
    %p112 = scmp.lt.s32.totalorder %s9, 5
    %p113 = pnand %p111, %p112
    %p114 = pneg %p113
    // Predicated region
    $region9: #{conv_bn_relu_3d.1} parent=5 // pred_check
      _
    $region10: #{conv_bn_relu_3d.1} parent=5 // pred_check_branch
      %116 = sbr.rel (%p113) target = $region12
    $region11: #{conv_bn_relu_3d.1} parent=5 // pred_region
      %s117 = ssub.s32 %s9, 1
      // Predicated region
      $region13: #{conv_bn_relu_3d.1} parent=11 // pred_check
        %p118 = pneg %p56
      $region14: #{conv_bn_relu_3d.1} parent=11 // pred_check_branch
        %120 = sbr.rel (%p118) target = $region16
      $region15: #{conv_bn_relu_3d.1} parent=11 // pred_region
        _
      $region16: #{conv_bn_relu_3d.1} parent=11 // pred_fallthru
        _
      // Predicated region
      $region17: #{conv_bn_relu_3d.1} parent=11 // pred_check
        %p121 = pneg %p77
      $region18: #{conv_bn_relu_3d.1} parent=11 // pred_check_branch
        %123 = sbr.rel (%p121) target = $region20
      $region19: #{conv_bn_relu_3d.1} parent=11 // pred_region
        _
      $region20: #{conv_bn_relu_3d.1} parent=11 // pred_fallthru
        _
    $region12: #{conv_bn_relu_3d.1} parent=5 // pred_fallthru
      _
    %p124 = scmp.lt.s32.totalorder %s9, 4
    // Predicated region
    $region21: #{conv_bn_relu_3d.1} parent=5 // pred_check
      %p125 = pneg %p124
    $region22: #{conv_bn_relu_3d.1} parent=5 // pred_check_branch
      %127 = sbr.rel (%p125) target = $region24
    $region23: #{conv_bn_relu_3d.1} parent=5 // pred_region
      // Predicated region
      $region25: #{conv_bn_relu_3d.1} parent=23 // pred_check
        %p128 = pneg %p29
      $region26: #{conv_bn_relu_3d.1} parent=23 // pred_check_branch
        %130 = sbr.rel (%p128) target = $region28
      $region27: #{conv_bn_relu_3d.1} parent=23 // pred_region
        %s131 = smul.u32 16, %s9
        %p132 = scmp.lt.s32.totalorder %s131, 63
        %s133 = scalar_select %p132, %s131, 63
        %s134 = smul.addr %s133, 6
        %s135 = smul.addr %s134, 4
        %s136 = scalar_lea.vmem %s0, %s135
        %s137 = smul.u32 16, %s9
      $region28: #{conv_bn_relu_3d.1} parent=23 // pred_fallthru
        _
    $region24: #{conv_bn_relu_3d.1} parent=5 // pred_fallthru
      _
    %p138 = scmp.le.s32.totalorder 1, %s9
    %p139 = scmp.lt.s32.totalorder %s9, 5
    %p140 = pnand %p138, %p139
    %p141 = pneg %p140
    // Predicated region
    $region29: #{conv_bn_relu_3d.1} parent=5 // pred_check
      _
    $region30: #{conv_bn_relu_3d.1} parent=5 // pred_check_branch
      %143 = sbr.rel (%p140) target = $region32
    $region31: #{conv_bn_relu_3d.1} parent=5 // pred_region
      %s144 = ssub.s32 %s9, 1
      %s145 = smul.u32 16, %s14
      %p146 = scmp.lt.s32.totalorder %s145, 63
      %s147 = scalar_select %p146, %s145, 63
      %s148 = smul.addr %s147, 6
      %s149 = smul.addr %s148, 4
      %s150 = scalar_lea.vmem %s0, %s149
      %p151 = pneg %p35
      %p152 = pneg %p32
      %p153 = pneg %p56
      %p154 = pneg %p53
      %p155 = pneg %p77
      %p156 = pneg %p74
      %p157 = pneg %p103
      %p158 = pneg %p100
      %s159 = smul.u32 16, %s14
      %p160 = scmp.lt.s32.totalorder %s159, 63
      %s161 = scalar_select %p160, %s159, 63
      %s162 = smul.addr %s161, 8
      %s163 = scalar_lea.vmem %s3, %s162
      %s164 = smul.u32 16, %s14
      %p165 = scmp.lt.s32.totalorder %s164, 63
      %s166 = scalar_select %p165, %s164, 63
      %s167 = smul.addr %s166, 6
      %s168 = smul.addr %s167, 4
      %s169 = scalar_lea.vmem %s0, %s168
      %s170 = smul.u32 16, %s14
      %s171 = smul.u32 16, %s14
      %p172 = scmp.lt.s32.totalorder %s171, 63
      %s173 = scalar_select %p172, %s171, 63
      %s174 = smul.addr %s173, 8
      %s175 = scalar_lea.vmem %s3, %s174
      %s176 = smul.u32 16, %s14
      %v178 = vld [vmem:[%s169] sm:$0xff]
      %v179 = vld [vmem:[%s169 + $0x8] sm:$0xff]
      %v180 = vld [vmem:[%s169 + $0x10] sm:$0xff]
      %v181 = vld [vmem:[%s169 + $0x18] sm:$0xff]
      %v182 = vld [vmem:[%s169 + $0x20] sm:$0xff]
      %v183 = vld [vmem:[%s169 + $0x28] sm:$0xff]
      %v184 = vld [vmem:[%s169 + $0x30] sm:$0xff]
      %v185 = vld [vmem:[%s169 + $0x38] sm:$0xff]
      %v186 = vld [vmem:[%s169 + $0x40] sm:$0xff]
      %v187 = vld [vmem:[%s169 + $0x48] sm:$0xff]
      %v188 = vld [vmem:[%s169 + $0x50] sm:$0xff]
      %v189 = vld [vmem:[%s169 + $0x58] sm:$0xff]
      %v190 = vld [vmem:[%s169 + $0x60] sm:$0xff]
      %v191 = vld [vmem:[%s169 + $0x68] sm:$0xff]
      %v192 = vld [vmem:[%s169 + $0x70] sm:$0xff]
      %v193 = vld [vmem:[%s169 + $0x78] sm:$0xff]
      %v194 = vld [vmem:[%s169 + $0x80] sm:$0xff]
      %v195 = vld [vmem:[%s169 + $0x88] sm:$0xff]
      %v196 = vld [vmem:[%s169 + $0x90] sm:$0xff]
      %v197 = vld [vmem:[%s169 + $0x98] sm:$0xff]
      %v198 = vld [vmem:[%s169 + $0xa0] sm:$0xff]
      %v199 = vld [vmem:[%s169 + $0xa8] sm:$0xff]
      %v200 = vld [vmem:[%s169 + $0xb0] sm:$0xff]
      %v201 = vld [vmem:[%s169 + $0xb8] sm:$0xff]
      %v202 = vld [vmem:[%s169 + $0xc0] sm:$0xff]
      %v203 = vld [vmem:[%s169 + $0xc8] sm:$0xff]
      %v204 = vld [vmem:[%s169 + $0xd0] sm:$0xff]
      %v205 = vld [vmem:[%s169 + $0xd8] sm:$0xff]
      %v206 = vld [vmem:[%s169 + $0xe0] sm:$0xff]
      %v207 = vld [vmem:[%s169 + $0xe8] sm:$0xff]
      %v208 = vld [vmem:[%s169 + $0xf0] sm:$0xff]
      %v209 = vld [vmem:[%s169 + $0xf8] sm:$0xff]
      %v210 = vld [vmem:[%s169 + $0x100] sm:$0xff]
      %v211 = vld [vmem:[%s169 + $0x108] sm:$0xff]
      %v212 = vld [vmem:[%s169 + $0x110] sm:$0xff]
      %v213 = vld [vmem:[%s169 + $0x118] sm:$0xff]
      %v214 = vld [vmem:[%s169 + $0x120] sm:$0xff]
      %v215 = vld [vmem:[%s169 + $0x128] sm:$0xff]
      %v216 = vld [vmem:[%s169 + $0x130] sm:$0xff]
      %v217 = vld [vmem:[%s169 + $0x138] sm:$0xff]
      %v218 = vld [vmem:[%s169 + $0x140] sm:$0xff]
      %v219 = vld [vmem:[%s169 + $0x148] sm:$0xff]
      %v220 = vld [vmem:[%s169 + $0x150] sm:$0xff]
      %v221 = vld [vmem:[%s169 + $0x158] sm:$0xff]
      %v222 = vld [vmem:[%s169 + $0x160] sm:$0xff]
      %v223 = vld [vmem:[%s169 + $0x168] sm:$0xff]
      %v224 = vld [vmem:[%s169 + $0x170] sm:$0xff]
      %v225 = vld [vmem:[%s169 + $0x178] sm:$0xff]
      %v226 = vld [vmem:[%s1] sm:$0xf]
      %v227 = vld [vmem:[%s1 + $0x4] sm:$0xf]
      %v228 = vld [vmem:[%s1 + $0x8] sm:$0xf]
      %v229 = vld [vmem:[%s1 + $0xc] sm:$0xf]
      %v230 = vld [vmem:[%s1 + $0x10] sm:$0xf]
      %v231 = vld [vmem:[%s1 + $0x14] sm:$0xf]
      %v232 = vld [vmem:[%s1 + $0x18] sm:$0xf]
      %v233 = vld [vmem:[%s1 + $0x1c] sm:$0xf]
      %v234 = vld [vmem:[%s1 + $0x20] sm:$0xf]
      %v235 = vld [vmem:[%s1 + $0x24] sm:$0xf]
      %v236 = vld [vmem:[%s1 + $0x28] sm:$0xf]
      %v237 = vld [vmem:[%s1 + $0x2c] sm:$0xf]
      %v238 = vld [vmem:[%s1 + $0x30] sm:$0xf]
      %v239 = vld [vmem:[%s1 + $0x34] sm:$0xf]
      %v240 = vld [vmem:[%s1 + $0x38] sm:$0xf]
      %v241 = vld [vmem:[%s1 + $0x3c] sm:$0xf]
      %v242 = vld [vmem:[%s1 + $0x40] sm:$0xf]
      %v243 = vld [vmem:[%s1 + $0x44] sm:$0xf]
      %v244 = vld [vmem:[%s1 + $0x48] sm:$0xf]
      %v245 = vld [vmem:[%s1 + $0x4c] sm:$0xf]
      %v246 = vld [vmem:[%s1 + $0x50] sm:$0xf]
      %v247 = vld [vmem:[%s1 + $0x54] sm:$0xf]
      %v248 = vld [vmem:[%s1 + $0x58] sm:$0xf]
      %v249 = vld [vmem:[%s1 + $0x5c] sm:$0xf]
      %v250 = vld [vmem:[%s1 + $0x60] sm:$0xf]
      %v251 = vld [vmem:[%s1 + $0x64] sm:$0xf]
      %v252 = vld [vmem:[%s1 + $0x68] sm:$0xf]
      %v253 = vld [vmem:[%s1 + $0x6c] sm:$0xf]
      %v254 = vld [vmem:[%s1 + $0x70] sm:$0xf]
      %v255 = vld [vmem:[%s1 + $0x74] sm:$0xf]
      %v256 = vld [vmem:[%s1 + $0x78] sm:$0xf]
      %v257 = vld [vmem:[%s1 + $0x7c] sm:$0xf]
      %v258 = vld [vmem:[%s1 + $0x80] sm:$0xf]
      %v259 = vld [vmem:[%s1 + $0x84] sm:$0xf]
      %v260 = vld [vmem:[%s1 + $0x88] sm:$0xf]
      %v261 = vld [vmem:[%s1 + $0x8c] sm:$0xf]
      %v262 = vld [vmem:[%s1 + $0x90] sm:$0xf]
      %v263 = vld [vmem:[%s1 + $0x94] sm:$0xf]
      %v264 = vld [vmem:[%s1 + $0x98] sm:$0xf]
      %v265 = vld [vmem:[%s1 + $0x9c] sm:$0xf]
      %v266 = vld [vmem:[%s1 + $0xa0] sm:$0xf]
      %v267 = vld [vmem:[%s1 + $0xa4] sm:$0xf]
      %v268 = vld [vmem:[%s1 + $0xa8] sm:$0xf]
      %v269 = vld [vmem:[%s1 + $0xac] sm:$0xf]
      %v270 = vld [vmem:[%s1 + $0xb0] sm:$0xf]
      %v271 = vld [vmem:[%s1 + $0xb4] sm:$0xf]
      %v272 = vld [vmem:[%s1 + $0xb8] sm:$0xf]
      %v273 = vld [vmem:[%s1 + $0xbc] sm:$0xf]
      %v274 = vld [vmem:[%s1 + $0xc0] sm:$0xf]
      %v275 = vld [vmem:[%s1 + $0xc4] sm:$0xf]
      %v276 = vld [vmem:[%s1 + $0xc8] sm:$0xf]
      %v277 = vld [vmem:[%s1 + $0xcc] sm:$0xf]
      %v278 = vld [vmem:[%s1 + $0xd0] sm:$0xf]
      %v279 = vld [vmem:[%s1 + $0xd4] sm:$0xf]
      %v280 = vld [vmem:[%s1 + $0xd8] sm:$0xf]
      %v281 = vld [vmem:[%s1 + $0xdc] sm:$0xf]
      %v282 = vld [vmem:[%s1 + $0xe0] sm:$0xf]
      %v283 = vld [vmem:[%s1 + $0xe4] sm:$0xf]
      %v284 = vld [vmem:[%s1 + $0xe8] sm:$0xf]
      %v285 = vld [vmem:[%s1 + $0xec] sm:$0xf]
      %v286 = vld [vmem:[%s1 + $0xf0] sm:$0xf]
      %v287 = vld [vmem:[%s1 + $0xf4] sm:$0xf]
      %v288 = vld [vmem:[%s1 + $0xf8] sm:$0xf]
      %v289 = vld [vmem:[%s1 + $0xfc] sm:$0xf]
      %v290 = vld [vmem:[%s1 + $0x100] sm:$0xf]
      %v291 = vld [vmem:[%s1 + $0x104] sm:$0xf]
      %v292 = vld [vmem:[%s1 + $0x108] sm:$0xf]
      %v293 = vld [vmem:[%s1 + $0x10c] sm:$0xf]
      %v294 = vld [vmem:[%s1 + $0x110] sm:$0xf]
      %v295 = vld [vmem:[%s1 + $0x114] sm:$0xf]
      %v296 = vld [vmem:[%s1 + $0x118] sm:$0xf]
      %v297 = vld [vmem:[%s1 + $0x11c] sm:$0xf]
      %v298 = vld [vmem:[%s1 + $0x120] sm:$0xf]
      %v299 = vld [vmem:[%s1 + $0x124] sm:$0xf]
      %v300 = vld [vmem:[%s1 + $0x128] sm:$0xf]
      %v301 = vld [vmem:[%s1 + $0x12c] sm:$0xf]
      %v302 = vld [vmem:[%s1 + $0x130] sm:$0xf]
      %v303 = vld [vmem:[%s1 + $0x134] sm:$0xf]
      %v304 = vld [vmem:[%s1 + $0x138] sm:$0xf]
      %v305 = vld [vmem:[%s1 + $0x13c] sm:$0xf]
      %v306 = vld [vmem:[%s1 + $0x140] sm:$0xf]
      %v307 = vld [vmem:[%s1 + $0x144] sm:$0xf]
      %v308 = vld [vmem:[%s1 + $0x148] sm:$0xf]
      %v309 = vld [vmem:[%s1 + $0x14c] sm:$0xf]
      %v310 = vld [vmem:[%s1 + $0x150] sm:$0xf]
      %v311 = vld [vmem:[%s1 + $0x154] sm:$0xf]
      %v312 = vld [vmem:[%s1 + $0x158] sm:$0xf]
      %v313 = vld [vmem:[%s1 + $0x15c] sm:$0xf]
      %v314 = vld [vmem:[%s1 + $0x160] sm:$0xf]
      %v315 = vld [vmem:[%s1 + $0x164] sm:$0xf]
      %v316 = vld [vmem:[%s1 + $0x168] sm:$0xf]
      %v317 = vld [vmem:[%s1 + $0x16c] sm:$0xf]
      %v318 = vld [vmem:[%s1 + $0x170] sm:$0xf]
      %v319 = vld [vmem:[%s1 + $0x174] sm:$0xf]
      %v320 = vld [vmem:[%s1 + $0x178] sm:$0xf]
      %v321 = vld [vmem:[%s1 + $0x17c] sm:$0xf]
      %v322 = vld [vmem:[%s2] sm:$0x1]
      %v324 = vlaneseq
      %v325 = vshrl.u32 %v324, 7
      %v326 = vsub.s32 0, %v325
      %v327 = vrot.slane %v322, %v326
      %v377 = vunpack.c.l.b16 %v178
      %v378 = vunpack.c.h.b16 %v178
      %v379 = vunpack.c.l.b16 %v179
      %v380 = vunpack.c.h.b16 %v179
      %v381 = vunpack.c.l.b16 %v180
      %v382 = vunpack.c.h.b16 %v180
      %v383 = vunpack.c.l.b16 %v181
      %v384 = vunpack.c.h.b16 %v181
      %v385 = vunpack.c.l.b16 %v182
      %v386 = vunpack.c.h.b16 %v182
      %v387 = vunpack.c.l.b16 %v183
      %v388 = vunpack.c.h.b16 %v183
      %v389 = vunpack.c.l.b16 %v184
      %v390 = vunpack.c.h.b16 %v184
      %v391 = vunpack.c.l.b16 %v185
      %v392 = vunpack.c.h.b16 %v185
      %v393 = vunpack.c.l.b16 %v186
      %v394 = vunpack.c.h.b16 %v186
      %v395 = vunpack.c.l.b16 %v187
      %v396 = vunpack.c.h.b16 %v187
      %v397 = vunpack.c.l.b16 %v188
      %v398 = vunpack.c.h.b16 %v188
      %v399 = vunpack.c.l.b16 %v189
      %v400 = vunpack.c.h.b16 %v189
      %v401 = vunpack.c.l.b16 %v190
      %v402 = vunpack.c.h.b16 %v190
      %v403 = vunpack.c.l.b16 %v191
      %v404 = vunpack.c.h.b16 %v191
      %v405 = vunpack.c.l.b16 %v192
      %v406 = vunpack.c.h.b16 %v192
      %v407 = vunpack.c.l.b16 %v193
      %v408 = vunpack.c.h.b16 %v193
      %v409 = vunpack.c.l.b16 %v194
      %v410 = vunpack.c.h.b16 %v194
      %v411 = vunpack.c.l.b16 %v195
      %v412 = vunpack.c.h.b16 %v195
      %v413 = vunpack.c.l.b16 %v196
      %v414 = vunpack.c.h.b16 %v196
      %v415 = vunpack.c.l.b16 %v197
      %v416 = vunpack.c.h.b16 %v197
      %v417 = vunpack.c.l.b16 %v198
      %v418 = vunpack.c.h.b16 %v198
      %v419 = vunpack.c.l.b16 %v199
      %v420 = vunpack.c.h.b16 %v199
      %v421 = vunpack.c.l.b16 %v200
      %v422 = vunpack.c.h.b16 %v200
      %v423 = vunpack.c.l.b16 %v201
      %v424 = vunpack.c.h.b16 %v201
      %v425 = vunpack.c.l.b16 %v202
      %v426 = vunpack.c.h.b16 %v202
      %v427 = vunpack.c.l.b16 %v203
      %v428 = vunpack.c.h.b16 %v203
      %v429 = vunpack.c.l.b16 %v204
      %v430 = vunpack.c.h.b16 %v204
      %v431 = vunpack.c.l.b16 %v205
      %v432 = vunpack.c.h.b16 %v205
      %v433 = vunpack.c.l.b16 %v206
      %v434 = vunpack.c.h.b16 %v206
      %v435 = vunpack.c.l.b16 %v207
      %v436 = vunpack.c.h.b16 %v207
      %v437 = vunpack.c.l.b16 %v208
      %v438 = vunpack.c.h.b16 %v208
      %v439 = vunpack.c.l.b16 %v209
      %v440 = vunpack.c.h.b16 %v209
      %v441 = vunpack.c.l.b16 %v210
      %v442 = vunpack.c.h.b16 %v210
      %v443 = vunpack.c.l.b16 %v211
      %v444 = vunpack.c.h.b16 %v211
      %v445 = vunpack.c.l.b16 %v212
      %v446 = vunpack.c.h.b16 %v212
      %v447 = vunpack.c.l.b16 %v213
      %v448 = vunpack.c.h.b16 %v213
      %v449 = vunpack.c.l.b16 %v214
      %v450 = vunpack.c.h.b16 %v214
      %v451 = vunpack.c.l.b16 %v215
      %v452 = vunpack.c.h.b16 %v215
      %v453 = vunpack.c.l.b16 %v216
      %v454 = vunpack.c.h.b16 %v216
      %v455 = vunpack.c.l.b16 %v217
      %v456 = vunpack.c.h.b16 %v217
      %v457 = vunpack.c.l.b16 %v218
      %v458 = vunpack.c.h.b16 %v218
      %v459 = vunpack.c.l.b16 %v219
      %v460 = vunpack.c.h.b16 %v219
      %v461 = vunpack.c.l.b16 %v220
      %v462 = vunpack.c.h.b16 %v220
      %v463 = vunpack.c.l.b16 %v221
      %v464 = vunpack.c.h.b16 %v221
      %v465 = vunpack.c.l.b16 %v222
      %v466 = vunpack.c.h.b16 %v222
      %v467 = vunpack.c.l.b16 %v223
      %v468 = vunpack.c.h.b16 %v223
      %v469 = vunpack.c.l.b16 %v224
      %v470 = vunpack.c.h.b16 %v224
      %v471 = vunpack.c.l.b16 %v225
      %v472 = vunpack.c.h.b16 %v225
      %v473 = vpack.c.b16 %v383, %v377
      %v474 = vpack.c.b16 %v384, %v378
      %v475 = vpack.c.b16 %v385, %v379
      %v476 = vpack.c.b16 %v386, %v380
      %v477 = vpack.c.b16 %v387, %v381
      %v478 = vpack.c.b16 %v388, %v382
      %v479 = vpack.c.b16 %v395, %v389
      %v480 = vpack.c.b16 %v396, %v390
      %v481 = vpack.c.b16 %v397, %v391
      %v482 = vpack.c.b16 %v398, %v392
      %v483 = vpack.c.b16 %v399, %v393
      %v484 = vpack.c.b16 %v400, %v394
      %v485 = vpack.c.b16 %v407, %v401
      %v486 = vpack.c.b16 %v408, %v402
      %v487 = vpack.c.b16 %v409, %v403
      %v488 = vpack.c.b16 %v410, %v404
      %v489 = vpack.c.b16 %v411, %v405
      %v490 = vpack.c.b16 %v412, %v406
      %v491 = vpack.c.b16 %v419, %v413
      %v492 = vpack.c.b16 %v420, %v414
      %v493 = vpack.c.b16 %v421, %v415
      %v494 = vpack.c.b16 %v422, %v416
      %v495 = vpack.c.b16 %v423, %v417
      %v496 = vpack.c.b16 %v424, %v418
      %v497 = vpack.c.b16 %v431, %v425
      %v498 = vpack.c.b16 %v432, %v426
      %v499 = vpack.c.b16 %v433, %v427
      %v500 = vpack.c.b16 %v434, %v428
      %v501 = vpack.c.b16 %v435, %v429
      %v502 = vpack.c.b16 %v436, %v430
      %v503 = vpack.c.b16 %v443, %v437
      %v504 = vpack.c.b16 %v444, %v438
      %v505 = vpack.c.b16 %v445, %v439
      %v506 = vpack.c.b16 %v446, %v440
      %v507 = vpack.c.b16 %v447, %v441
      %v508 = vpack.c.b16 %v448, %v442
      %v509 = vpack.c.b16 %v455, %v449
      %v510 = vpack.c.b16 %v456, %v450
      %v511 = vpack.c.b16 %v457, %v451
      %v512 = vpack.c.b16 %v458, %v452
      %v513 = vpack.c.b16 %v459, %v453
      %v514 = vpack.c.b16 %v460, %v454
      %v515 = vpack.c.b16 %v467, %v461
      %v516 = vpack.c.b16 %v468, %v462
      %v517 = vpack.c.b16 %v469, %v463
      %v518 = vpack.c.b16 %v470, %v464
      %v519 = vpack.c.b16 %v471, %v465
      %v520 = vpack.c.b16 %v472, %v466
      %v665 = vunpack.c.l.b16 %v226
      %v666 = vunpack.c.l.b16 %v227
      %v667 = vunpack.c.l.b16 %v228
      %v668 = vunpack.c.l.b16 %v229
      %v669 = vunpack.c.l.b16 %v230
      %v670 = vunpack.c.l.b16 %v231
      %v671 = vunpack.c.l.b16 %v232
      %v672 = vunpack.c.l.b16 %v233
      %v673 = vunpack.c.l.b16 %v234
      %v674 = vunpack.c.l.b16 %v235
      %v675 = vunpack.c.l.b16 %v236
      %v676 = vunpack.c.l.b16 %v237
      %v677 = vunpack.c.l.b16 %v238
      %v678 = vunpack.c.l.b16 %v239
      %v679 = vunpack.c.l.b16 %v240
      %v680 = vunpack.c.l.b16 %v241
      %v681 = vunpack.c.l.b16 %v242
      %v682 = vunpack.c.l.b16 %v243
      %v683 = vunpack.c.l.b16 %v244
      %v684 = vunpack.c.l.b16 %v245
      %v685 = vunpack.c.l.b16 %v246
      %v686 = vunpack.c.l.b16 %v247
      %v687 = vunpack.c.l.b16 %v248
      %v688 = vunpack.c.l.b16 %v249
      %v689 = vunpack.c.l.b16 %v250
      %v690 = vunpack.c.l.b16 %v251
      %v691 = vunpack.c.l.b16 %v252
      %v692 = vunpack.c.l.b16 %v253
      %v693 = vunpack.c.l.b16 %v254
      %v694 = vunpack.c.l.b16 %v255
      %v695 = vunpack.c.l.b16 %v256
      %v696 = vunpack.c.l.b16 %v257
      %v697 = vunpack.c.l.b16 %v258
      %v698 = vunpack.c.l.b16 %v259
      %v699 = vunpack.c.l.b16 %v260
      %v700 = vunpack.c.l.b16 %v261
      %v701 = vunpack.c.l.b16 %v262
      %v702 = vunpack.c.l.b16 %v263
      %v703 = vunpack.c.l.b16 %v264
      %v704 = vunpack.c.l.b16 %v265
      %v705 = vunpack.c.l.b16 %v266
      %v706 = vunpack.c.l.b16 %v267
      %v707 = vunpack.c.l.b16 %v268
      %v708 = vunpack.c.l.b16 %v269
      %v709 = vunpack.c.l.b16 %v270
      %v710 = vunpack.c.l.b16 %v271
      %v711 = vunpack.c.l.b16 %v272
      %v712 = vunpack.c.l.b16 %v273
      %v713 = vunpack.c.l.b16 %v274
      %v714 = vunpack.c.l.b16 %v275
      %v715 = vunpack.c.l.b16 %v276
      %v716 = vunpack.c.l.b16 %v277
      %v717 = vunpack.c.l.b16 %v278
      %v718 = vunpack.c.l.b16 %v279
      %v719 = vunpack.c.l.b16 %v280
      %v720 = vunpack.c.l.b16 %v281
      %v721 = vunpack.c.l.b16 %v282
      %v722 = vunpack.c.l.b16 %v283
      %v723 = vunpack.c.l.b16 %v284
      %v724 = vunpack.c.l.b16 %v285
      %v725 = vunpack.c.l.b16 %v286
      %v726 = vunpack.c.l.b16 %v287
      %v727 = vunpack.c.l.b16 %v288
      %v728 = vunpack.c.l.b16 %v289
      %v729 = vunpack.c.l.b16 %v290
      %v730 = vunpack.c.l.b16 %v291
      %v731 = vunpack.c.l.b16 %v292
      %v732 = vunpack.c.l.b16 %v293
      %v733 = vunpack.c.l.b16 %v294
      %v734 = vunpack.c.l.b16 %v295
      %v735 = vunpack.c.l.b16 %v296
      %v736 = vunpack.c.l.b16 %v297
      %v737 = vunpack.c.l.b16 %v298
      %v738 = vunpack.c.l.b16 %v299
      %v739 = vunpack.c.l.b16 %v300
      %v740 = vunpack.c.l.b16 %v301
      %v741 = vunpack.c.l.b16 %v302
      %v742 = vunpack.c.l.b16 %v303
      %v743 = vunpack.c.l.b16 %v304
      %v744 = vunpack.c.l.b16 %v305
      %v745 = vunpack.c.l.b16 %v306
      %v746 = vunpack.c.l.b16 %v307
      %v747 = vunpack.c.l.b16 %v308
      %v748 = vunpack.c.l.b16 %v309
      %v749 = vunpack.c.l.b16 %v310
      %v750 = vunpack.c.l.b16 %v311
      %v751 = vunpack.c.l.b16 %v312
      %v752 = vunpack.c.l.b16 %v313
      %v753 = vunpack.c.l.b16 %v314
      %v754 = vunpack.c.l.b16 %v315
      %v755 = vunpack.c.l.b16 %v316
      %v756 = vunpack.c.l.b16 %v317
      %v757 = vunpack.c.l.b16 %v318
      %v758 = vunpack.c.l.b16 %v319
      %v759 = vunpack.c.l.b16 %v320
      %v760 = vunpack.c.l.b16 %v321
      %v761 = vpack.c.b16 %v666, %v665
      %v762 = vpack.c.b16 %v668, %v667
      %v763 = vpack.c.b16 %v670, %v669
      %v764 = vpack.c.b16 %v672, %v671
      %v765 = vpack.c.b16 %v674, %v673
      %v766 = vpack.c.b16 %v676, %v675
      %v767 = vpack.c.b16 %v678, %v677
      %v768 = vpack.c.b16 %v680, %v679
      %v769 = vpack.c.b16 %v682, %v681
      %v770 = vpack.c.b16 %v684, %v683
      %v771 = vpack.c.b16 %v686, %v685
      %v772 = vpack.c.b16 %v688, %v687
      %v773 = vpack.c.b16 %v690, %v689
      %v774 = vpack.c.b16 %v692, %v691
      %v775 = vpack.c.b16 %v694, %v693
      %v776 = vpack.c.b16 %v696, %v695
      %v777 = vpack.c.b16 %v698, %v697
      %v778 = vpack.c.b16 %v700, %v699
      %v779 = vpack.c.b16 %v702, %v701
      %v780 = vpack.c.b16 %v704, %v703
      %v781 = vpack.c.b16 %v706, %v705
      %v782 = vpack.c.b16 %v708, %v707
      %v783 = vpack.c.b16 %v710, %v709
      %v784 = vpack.c.b16 %v712, %v711
      %v785 = vpack.c.b16 %v714, %v713
      %v786 = vpack.c.b16 %v716, %v715
      %v787 = vpack.c.b16 %v718, %v717
      %v788 = vpack.c.b16 %v720, %v719
      %v789 = vpack.c.b16 %v722, %v721
      %v790 = vpack.c.b16 %v724, %v723
      %v791 = vpack.c.b16 %v726, %v725
      %v792 = vpack.c.b16 %v728, %v727
      %v793 = vpack.c.b16 %v730, %v729
      %v794 = vpack.c.b16 %v732, %v731
      %v795 = vpack.c.b16 %v734, %v733
      %v796 = vpack.c.b16 %v736, %v735
      %v797 = vpack.c.b16 %v738, %v737
      %v798 = vpack.c.b16 %v740, %v739
      %v799 = vpack.c.b16 %v742, %v741
      %v800 = vpack.c.b16 %v744, %v743
      %v801 = vpack.c.b16 %v746, %v745
      %v802 = vpack.c.b16 %v748, %v747
      %v803 = vpack.c.b16 %v750, %v749
      %v804 = vpack.c.b16 %v752, %v751
      %v805 = vpack.c.b16 %v754, %v753
      %v806 = vpack.c.b16 %v756, %v755
      %v807 = vpack.c.b16 %v758, %v757
      %v808 = vpack.c.b16 %v760, %v759
      %857 = vmatprep.subr.bf16.mxu0 0
      %858 = vmatpush1.bf16.msra.mxu0 %v768
      %859 = vmatprep.subr.bf16.mxu0 0
      %860 = vmatpush1.bf16.msra.mxu0 %v767
      %861 = vmatprep.subr.bf16.mxu0 0
      %862 = vmatpush1.bf16.msra.mxu0 %v766
      %863 = vmatprep.subr.bf16.mxu0 0
      %864 = vmatpush1.bf16.msra.mxu0 %v765
      %865 = vmatprep.subr.bf16.mxu0 0
      %866 = vmatpush1.bf16.msra.mxu0 %v764
      %867 = vmatprep.subr.bf16.mxu0 0
      %868 = vmatpush1.bf16.msra.mxu0 %v763
      %869 = vmatprep.subr.bf16.mxu0 0
      %870 = vmatpush1.bf16.msra.mxu0 %v762
      %871 = vmatprep.subr.bf16.mxu0 0
      %872 = vmatpush1.bf16.msra.mxu0 %v761
      %873 = vmatprep.subr.bf16.mxu0 0
      %874 = vmatpush2.bf16.msra.mxu0 %v776
      %875 = vmatprep.subr.bf16.mxu0 0
      %876 = vmatpush2.bf16.msra.mxu0 %v775
      %877 = vmatprep.subr.bf16.mxu0 0
      %878 = vmatpush2.bf16.msra.mxu0 %v774
      %879 = vmatprep.subr.bf16.mxu0 0
      %880 = vmatpush2.bf16.msra.mxu0 %v773
      %881 = vmatprep.subr.bf16.mxu0 0
      %882 = vmatpush2.bf16.msra.mxu0 %v772
      %883 = vmatprep.subr.bf16.mxu0 0
      %884 = vmatpush2.bf16.msra.mxu0 %v771
      %885 = vmatprep.subr.bf16.mxu0 0
      %886 = vmatpush2.bf16.msra.mxu0 %v770
      %887 = vmatprep.subr.bf16.mxu0 0
      %888 = vmatpush2.bf16.msra.mxu0 %v769
      %889 = vmatprep.mubr.bf16.mxu0 %v474
      %890 = vmatmul.mubr.bf16.gmra.mxu0 %v473
      %v891 = vpop.f32.mrf.mxu0
      %v892 = vadd.f32 %v327, %v891
      %v893 = vpop.f32.mrf.mxu0
      %v894 = vpop.f32.mrf.mxu0
      %v895 = vadd.f32 %v327, %v894
      %v896 = vpop.f32.mrf.mxu0
      %897 = vmatprep.mubr.bf16.mxu0 %v480
      %898 = vmatmul.mubr.bf16.gmra.mxu0 %v479
      %v899 = vpop.f32.mrf.mxu0
      %v900 = vadd.f32 %v327, %v899
      %v901 = vpop.f32.mrf.mxu0
      %v902 = vpop.f32.mrf.mxu0
      %v903 = vadd.f32 %v327, %v902
      %v904 = vpop.f32.mrf.mxu0
      %905 = vmatprep.mubr.bf16.mxu0 %v486
      %906 = vmatmul.mubr.bf16.gmra.mxu0 %v485
      %v907 = vpop.f32.mrf.mxu0
      %v908 = vadd.f32 %v327, %v907
      %v909 = vpop.f32.mrf.mxu0
      %v910 = vpop.f32.mrf.mxu0
      %v911 = vadd.f32 %v327, %v910
      %v912 = vpop.f32.mrf.mxu0
      %913 = vmatprep.mubr.bf16.mxu0 %v492
      %914 = vmatmul.mubr.bf16.gmra.mxu0 %v491
      %v915 = vpop.f32.mrf.mxu0
      %v916 = vadd.f32 %v327, %v915
      %v917 = vpop.f32.mrf.mxu0
      %v918 = vpop.f32.mrf.mxu0
      %v919 = vadd.f32 %v327, %v918
      %v920 = vpop.f32.mrf.mxu0
      %921 = vmatprep.mubr.bf16.mxu0 %v498
      %922 = vmatmul.mubr.bf16.gmra.mxu0 %v497
      %v923 = vpop.f32.mrf.mxu0
      %v924 = vadd.f32 %v327, %v923
      %v925 = vpop.f32.mrf.mxu0
      %v926 = vpop.f32.mrf.mxu0
      %v927 = vadd.f32 %v327, %v926
      %v928 = vpop.f32.mrf.mxu0
      %929 = vmatprep.mubr.bf16.mxu0 %v504
      %930 = vmatmul.mubr.bf16.gmra.mxu0 %v503
      %v931 = vpop.f32.mrf.mxu0
      %v932 = vadd.f32 %v327, %v931
      %v933 = vpop.f32.mrf.mxu0
      %v934 = vpop.f32.mrf.mxu0
      %v935 = vadd.f32 %v327, %v934
      %v936 = vpop.f32.mrf.mxu0
      %937 = vmatprep.mubr.bf16.mxu0 %v510
      %938 = vmatmul.mubr.bf16.gmra.mxu0 %v509
      %v939 = vpop.f32.mrf.mxu0
      %v940 = vadd.f32 %v327, %v939
      %v941 = vpop.f32.mrf.mxu0
      %v942 = vpop.f32.mrf.mxu0
      %v943 = vadd.f32 %v327, %v942
      %v944 = vpop.f32.mrf.mxu0
      %945 = vmatprep.mubr.bf16.mxu0 %v516
      %946 = vmatmul.mubr.bf16.gmra.mxu0 %v515
      %v947 = vpop.f32.mrf.mxu0
      %v948 = vadd.f32 %v327, %v947
      %v949 = vpop.f32.mrf.mxu0
      %v950 = vpop.f32.mrf.mxu0
      %v951 = vadd.f32 %v327, %v950
      %v952 = vpop.f32.mrf.mxu0
      %953 = vdwg.mxu0
      %954 = vmatprep.subr.bf16.mxu0 0
      %955 = vmatpush1.bf16.msra.mxu0 %v784
      %956 = vmatprep.subr.bf16.mxu0 0
      %957 = vmatpush1.bf16.msra.mxu0 %v783
      %958 = vmatprep.subr.bf16.mxu0 0
      %959 = vmatpush1.bf16.msra.mxu0 %v782
      %960 = vmatprep.subr.bf16.mxu0 0
      %961 = vmatpush1.bf16.msra.mxu0 %v781
      %962 = vmatprep.subr.bf16.mxu0 0
      %963 = vmatpush1.bf16.msra.mxu0 %v780
      %964 = vmatprep.subr.bf16.mxu0 0
      %965 = vmatpush1.bf16.msra.mxu0 %v779
      %966 = vmatprep.subr.bf16.mxu0 0
      %967 = vmatpush1.bf16.msra.mxu0 %v778
      %968 = vmatprep.subr.bf16.mxu0 0
      %969 = vmatpush1.bf16.msra.mxu0 %v777
      %970 = vmatprep.subr.bf16.mxu0 0
      %971 = vmatpush2.bf16.msra.mxu0 %v792
      %972 = vmatprep.subr.bf16.mxu0 0
      %973 = vmatpush2.bf16.msra.mxu0 %v791
      %974 = vmatprep.subr.bf16.mxu0 0
      %975 = vmatpush2.bf16.msra.mxu0 %v790
      %976 = vmatprep.subr.bf16.mxu0 0
      %977 = vmatpush2.bf16.msra.mxu0 %v789
      %978 = vmatprep.subr.bf16.mxu0 0
      %979 = vmatpush2.bf16.msra.mxu0 %v788
      %980 = vmatprep.subr.bf16.mxu0 0
      %981 = vmatpush2.bf16.msra.mxu0 %v787
      %982 = vmatprep.subr.bf16.mxu0 0
      %983 = vmatpush2.bf16.msra.mxu0 %v786
      %984 = vmatprep.subr.bf16.mxu0 0
      %985 = vmatpush2.bf16.msra.mxu0 %v785
      %986 = vmatprep.mubr.bf16.mxu0 %v476
      %987 = vmatmul.mubr.bf16.gmra.mxu0 %v475
      %v988 = vpop.f32.mrf.mxu0
      %v989 = vadd.f32 %v892, %v988
      %v990 = vpop.f32.mrf.mxu0
      %v991 = vpop.f32.mrf.mxu0
      %v992 = vadd.f32 %v895, %v991
      %v993 = vpop.f32.mrf.mxu0
      %994 = vmatprep.mubr.bf16.mxu0 %v482
      %995 = vmatmul.mubr.bf16.gmra.mxu0 %v481
      %v996 = vpop.f32.mrf.mxu0
      %v997 = vadd.f32 %v900, %v996
      %v998 = vpop.f32.mrf.mxu0
      %v999 = vpop.f32.mrf.mxu0
      %v1000 = vadd.f32 %v903, %v999
      %v1001 = vpop.f32.mrf.mxu0
      %1002 = vmatprep.mubr.bf16.mxu0 %v488
      %1003 = vmatmul.mubr.bf16.gmra.mxu0 %v487
      %v1004 = vpop.f32.mrf.mxu0
      %v1005 = vadd.f32 %v908, %v1004
      %v1006 = vpop.f32.mrf.mxu0
      %v1007 = vpop.f32.mrf.mxu0
      %v1008 = vadd.f32 %v911, %v1007
      %v1009 = vpop.f32.mrf.mxu0
      %1010 = vmatprep.mubr.bf16.mxu0 %v494
      %1011 = vmatmul.mubr.bf16.gmra.mxu0 %v493
      %v1012 = vpop.f32.mrf.mxu0
      %v1013 = vadd.f32 %v916, %v1012
      %v1014 = vpop.f32.mrf.mxu0
      %v1015 = vpop.f32.mrf.mxu0
      %v1016 = vadd.f32 %v919, %v1015
      %v1017 = vpop.f32.mrf.mxu0
      %1018 = vmatprep.mubr.bf16.mxu0 %v500
      %1019 = vmatmul.mubr.bf16.gmra.mxu0 %v499
      %v1020 = vpop.f32.mrf.mxu0
      %v1021 = vadd.f32 %v924, %v1020
      %v1022 = vpop.f32.mrf.mxu0
      %v1023 = vpop.f32.mrf.mxu0
      %v1024 = vadd.f32 %v927, %v1023
      %v1025 = vpop.f32.mrf.mxu0
      %1026 = vmatprep.mubr.bf16.mxu0 %v506
      %1027 = vmatmul.mubr.bf16.gmra.mxu0 %v505
      %v1028 = vpop.f32.mrf.mxu0
      %v1029 = vadd.f32 %v932, %v1028
      %v1030 = vpop.f32.mrf.mxu0
      %v1031 = vpop.f32.mrf.mxu0
      %v1032 = vadd.f32 %v935, %v1031
      %v1033 = vpop.f32.mrf.mxu0
      %1034 = vmatprep.mubr.bf16.mxu0 %v512
      %1035 = vmatmul.mubr.bf16.gmra.mxu0 %v511
      %v1036 = vpop.f32.mrf.mxu0
      %v1037 = vadd.f32 %v940, %v1036
      %v1038 = vpop.f32.mrf.mxu0
      %v1039 = vpop.f32.mrf.mxu0
      %v1040 = vadd.f32 %v943, %v1039
      %v1041 = vpop.f32.mrf.mxu0
      %1042 = vmatprep.mubr.bf16.mxu0 %v518
      %1043 = vmatmul.mubr.bf16.gmra.mxu0 %v517
      %v1044 = vpop.f32.mrf.mxu0
      %v1045 = vadd.f32 %v948, %v1044
      %v1046 = vpop.f32.mrf.mxu0
      %v1047 = vpop.f32.mrf.mxu0
      %v1048 = vadd.f32 %v951, %v1047
      %v1049 = vpop.f32.mrf.mxu0
      %1050 = vdwg.mxu0
      %1051 = vmatprep.subr.bf16.mxu0 0
      %1052 = vmatpush1.bf16.msra.mxu0 %v800
      %1053 = vmatprep.subr.bf16.mxu0 0
      %1054 = vmatpush1.bf16.msra.mxu0 %v799
      %1055 = vmatprep.subr.bf16.mxu0 0
      %1056 = vmatpush1.bf16.msra.mxu0 %v798
      %1057 = vmatprep.subr.bf16.mxu0 0
      %1058 = vmatpush1.bf16.msra.mxu0 %v797
      %1059 = vmatprep.subr.bf16.mxu0 0
      %1060 = vmatpush1.bf16.msra.mxu0 %v796
      %1061 = vmatprep.subr.bf16.mxu0 0
      %1062 = vmatpush1.bf16.msra.mxu0 %v795
      %1063 = vmatprep.subr.bf16.mxu0 0
      %1064 = vmatpush1.bf16.msra.mxu0 %v794
      %1065 = vmatprep.subr.bf16.mxu0 0
      %1066 = vmatpush1.bf16.msra.mxu0 %v793
      %1067 = vmatprep.subr.bf16.mxu0 0
      %1068 = vmatpush2.bf16.msra.mxu0 %v808
      %1069 = vmatprep.subr.bf16.mxu0 0
      %1070 = vmatpush2.bf16.msra.mxu0 %v807
      %1071 = vmatprep.subr.bf16.mxu0 0
      %1072 = vmatpush2.bf16.msra.mxu0 %v806
      %1073 = vmatprep.subr.bf16.mxu0 0
      %1074 = vmatpush2.bf16.msra.mxu0 %v805
      %1075 = vmatprep.subr.bf16.mxu0 0
      %1076 = vmatpush2.bf16.msra.mxu0 %v804
      %1077 = vmatprep.subr.bf16.mxu0 0
      %1078 = vmatpush2.bf16.msra.mxu0 %v803
      %1079 = vmatprep.subr.bf16.mxu0 0
      %1080 = vmatpush2.bf16.msra.mxu0 %v802
      %1081 = vmatprep.subr.bf16.mxu0 0
      %1082 = vmatpush2.bf16.msra.mxu0 %v801
      %1083 = vmatprep.mubr.bf16.mxu0 %v478
      %1084 = vmatmul.mubr.bf16.gmra.mxu0 %v477
      %v1085 = vpop.f32.mrf.mxu0
      %v1086 = vadd.f32 %v989, %v1085
      %v1087 = vpop.f32.mrf.mxu0
      %v1088 = vpop.f32.mrf.mxu0
      %v1089 = vadd.f32 %v992, %v1088
      %v1090 = vpop.f32.mrf.mxu0
      %1091 = vmatprep.mubr.bf16.mxu0 %v484
      %1092 = vmatmul.mubr.bf16.gmra.mxu0 %v483
      %v1093 = vpop.f32.mrf.mxu0
      %v1094 = vadd.f32 %v997, %v1093
      %v1095 = vpop.f32.mrf.mxu0
      %v1096 = vpop.f32.mrf.mxu0
      %v1097 = vadd.f32 %v1000, %v1096
      %v1098 = vpop.f32.mrf.mxu0
      %1099 = vmatprep.mubr.bf16.mxu0 %v490
      %1100 = vmatmul.mubr.bf16.gmra.mxu0 %v489
      %v1101 = vpop.f32.mrf.mxu0
      %v1102 = vadd.f32 %v1005, %v1101
      %v1103 = vpop.f32.mrf.mxu0
      %v1104 = vpop.f32.mrf.mxu0
      %v1105 = vadd.f32 %v1008, %v1104
      %v1106 = vpop.f32.mrf.mxu0
      %1107 = vmatprep.mubr.bf16.mxu0 %v496
      %1108 = vmatmul.mubr.bf16.gmra.mxu0 %v495
      %v1109 = vpop.f32.mrf.mxu0
      %v1110 = vadd.f32 %v1013, %v1109
      %v1111 = vpop.f32.mrf.mxu0
      %v1112 = vpop.f32.mrf.mxu0
      %v1113 = vadd.f32 %v1016, %v1112
      %v1114 = vpop.f32.mrf.mxu0
      %1115 = vmatprep.mubr.bf16.mxu0 %v502
      %1116 = vmatmul.mubr.bf16.gmra.mxu0 %v501
      %v1117 = vpop.f32.mrf.mxu0
      %v1118 = vadd.f32 %v1021, %v1117
      %v1119 = vpop.f32.mrf.mxu0
      %v1120 = vpop.f32.mrf.mxu0
      %v1121 = vadd.f32 %v1024, %v1120
      %v1122 = vpop.f32.mrf.mxu0
      %1123 = vmatprep.mubr.bf16.mxu0 %v508
      %1124 = vmatmul.mubr.bf16.gmra.mxu0 %v507
      %v1125 = vpop.f32.mrf.mxu0
      %v1126 = vadd.f32 %v1029, %v1125
      %v1127 = vpop.f32.mrf.mxu0
      %v1128 = vpop.f32.mrf.mxu0
      %v1129 = vadd.f32 %v1032, %v1128
      %v1130 = vpop.f32.mrf.mxu0
      %1131 = vmatprep.mubr.bf16.mxu0 %v514
      %1132 = vmatmul.mubr.bf16.gmra.mxu0 %v513
      %v1133 = vpop.f32.mrf.mxu0
      %v1134 = vadd.f32 %v1037, %v1133
      %v1135 = vpop.f32.mrf.mxu0
      %v1136 = vpop.f32.mrf.mxu0
      %v1137 = vadd.f32 %v1040, %v1136
      %v1138 = vpop.f32.mrf.mxu0
      %1139 = vmatprep.mubr.bf16.mxu0 %v520
      %1140 = vmatmul.mubr.bf16.gmra.mxu0 %v519
      %v1141 = vpop.f32.mrf.mxu0
      %v1142 = vadd.f32 %v1045, %v1141
      %v1143 = vpop.f32.mrf.mxu0
      %v1144 = vpop.f32.mrf.mxu0
      %v1145 = vadd.f32 %v1048, %v1144
      %v1146 = vpop.f32.mrf.mxu0
      %1147 = vdwg.mxu0
      %vm1148 = vcmp.ge.f32.partialorder %v1086, 0.0
      %vm1149 = vcmp.ge.f32.partialorder %v1089, 0.0
      %vm1150 = vcmp.ge.f32.partialorder %v1094, 0.0
      %vm1151 = vcmp.ge.f32.partialorder %v1097, 0.0
      %vm1152 = vcmp.ge.f32.partialorder %v1102, 0.0
      %vm1153 = vcmp.ge.f32.partialorder %v1105, 0.0
      %vm1154 = vcmp.ge.f32.partialorder %v1110, 0.0
      %vm1155 = vcmp.ge.f32.partialorder %v1113, 0.0
      %vm1156 = vcmp.ge.f32.partialorder %v1118, 0.0
      %vm1157 = vcmp.ge.f32.partialorder %v1121, 0.0
      %vm1158 = vcmp.ge.f32.partialorder %v1126, 0.0
      %vm1159 = vcmp.ge.f32.partialorder %v1129, 0.0
      %vm1160 = vcmp.ge.f32.partialorder %v1134, 0.0
      %vm1161 = vcmp.ge.f32.partialorder %v1137, 0.0
      %vm1162 = vcmp.ge.f32.partialorder %v1142, 0.0
      %vm1163 = vcmp.ge.f32.partialorder %v1145, 0.0
      %v1164 = vmul.f32 %v1086, 0.01
      %v1165 = vmul.f32 %v1089, 0.01
      %v1166 = vmul.f32 %v1094, 0.01
      %v1167 = vmul.f32 %v1097, 0.01
      %v1168 = vmul.f32 %v1102, 0.01
      %v1169 = vmul.f32 %v1105, 0.01
      %v1170 = vmul.f32 %v1110, 0.01
      %v1171 = vmul.f32 %v1113, 0.01
      %v1172 = vmul.f32 %v1118, 0.01
      %v1173 = vmul.f32 %v1121, 0.01
      %v1174 = vmul.f32 %v1126, 0.01
      %v1175 = vmul.f32 %v1129, 0.01
      %v1176 = vmul.f32 %v1134, 0.01
      %v1177 = vmul.f32 %v1137, 0.01
      %v1178 = vmul.f32 %v1142, 0.01
      %v1179 = vmul.f32 %v1145, 0.01
      %v1180 = vsel %vm1148, %v1086, %v1164
      %v1181 = vsel %vm1149, %v1089, %v1165
      %v1182 = vsel %vm1150, %v1094, %v1166
      %v1183 = vsel %vm1151, %v1097, %v1167
      %v1184 = vsel %vm1152, %v1102, %v1168
      %v1185 = vsel %vm1153, %v1105, %v1169
      %v1186 = vsel %vm1154, %v1110, %v1170
      %v1187 = vsel %vm1155, %v1113, %v1171
      %v1188 = vsel %vm1156, %v1118, %v1172
      %v1189 = vsel %vm1157, %v1121, %v1173
      %v1190 = vsel %vm1158, %v1126, %v1174
      %v1191 = vsel %vm1159, %v1129, %v1175
      %v1192 = vsel %vm1160, %v1134, %v1176
      %v1193 = vsel %vm1161, %v1137, %v1177
      %v1194 = vsel %vm1162, %v1142, %v1178
      %v1195 = vsel %vm1163, %v1145, %v1179
      %1196 = vst [vmem:[%s175] sm:$0xff] %v1180
      %1197 = vst [vmem:[%s175 + $0x8] sm:$0xff] %v1181
      %1198 = vst [vmem:[%s175 + $0x10] sm:$0xff] %v1182
      %1199 = vst [vmem:[%s175 + $0x18] sm:$0xff] %v1183
      %1200 = vst [vmem:[%s175 + $0x20] sm:$0xff] %v1184
      %1201 = vst [vmem:[%s175 + $0x28] sm:$0xff] %v1185
      %1202 = vst [vmem:[%s175 + $0x30] sm:$0xff] %v1186
      %1203 = vst [vmem:[%s175 + $0x38] sm:$0xff] %v1187
      %1204 = vst [vmem:[%s175 + $0x40] sm:$0xff] %v1188
      %1205 = vst [vmem:[%s175 + $0x48] sm:$0xff] %v1189
      %1206 = vst [vmem:[%s175 + $0x50] sm:$0xff] %v1190
      %1207 = vst [vmem:[%s175 + $0x58] sm:$0xff] %v1191
      %1208 = vst [vmem:[%s175 + $0x60] sm:$0xff] %v1192
      %1209 = vst [vmem:[%s175 + $0x68] sm:$0xff] %v1193
      %1210 = vst [vmem:[%s175 + $0x70] sm:$0xff] %v1194
      %1211 = vst [vmem:[%s175 + $0x78] sm:$0xff] %v1195
      %s1212 = smul.u32 16, %s14
      %p1213 = scmp.lt.s32.totalorder %s1212, 63
      %s1214 = scalar_select %p1213, %s1212, 63
      %s1215 = smul.addr %s1214, 8
      %s1216 = scalar_lea.vmem %s3, %s1215
      // Predicated region
      $region33: #{conv_bn_relu_3d.1} parent=31 // pred_check
        %p1217 = pneg %p100
      $region34: #{conv_bn_relu_3d.1} parent=31 // pred_check_branch
        %1219 = sbr.rel (%p1217) target = $region36
      $region35: #{conv_bn_relu_3d.1} parent=31 // pred_region
        %s1220 = smul.u32 16, %s14
      $region36: #{conv_bn_relu_3d.1} parent=31 // pred_fallthru
        _
    $region32: #{conv_bn_relu_3d.1} parent=5 // pred_fallthru
      _
    %p1221 = scmp.le.s32.totalorder 2, %s9
    // Predicated region
    $region37: #{conv_bn_relu_3d.1} parent=5 // pred_check
      %p1222 = pneg %p1221
    $region38: #{conv_bn_relu_3d.1} parent=5 // pred_check_branch
      %1224 = sbr.rel (%p1222) target = $region40
    $region39: #{conv_bn_relu_3d.1} parent=5 // pred_region
      %s1225 = ssub.s32 %s9, 2
      // Predicated region
      $region41: #{conv_bn_relu_3d.1} parent=39 // pred_check
        %p1226 = pneg %p106
      $region42: #{conv_bn_relu_3d.1} parent=39 // pred_check_branch
        %1228 = sbr.rel (%p1226) target = $region44
      $region43: #{conv_bn_relu_3d.1} parent=39 // pred_region
        %s1229 = smul.u32 16, %s15
        %p1230 = scmp.lt.s32.totalorder %s1229, 63
        %s1231 = scalar_select %p1230, %s1229, 63
        %s1232 = smul.addr %s1231, 8
        %s1233 = scalar_lea.vmem %s3, %s1232
      $region44: #{conv_bn_relu_3d.1} parent=39 // pred_fallthru
        _
    $region40: #{conv_bn_relu_3d.1} parent=5 // pred_fallthru
      _
  $region6: #{conv_bn_relu_3d.1} parent=0 // loop_footer
    %s13 = sadd.s32 1, %s9
  $region7: #{conv_bn_relu_3d.1} parent=0 // loop_footer_branch
    %8 = sbr.rel target = $region3
  $region8: #{conv_bn_relu_3d.1} parent=0 // loop_exit
    _

</llo_original>
